<compile_context>
chip_gen: v6e
topology: v6e:2x2x1
jax: 0.10.0
libtpu: 0.0.40
codegen_flags: <defaults>
</compile_context>

<pallas_src>
import functools
import math

import jax
import jax.numpy as jnp
import numpy as np
from jax.experimental import pallas as pl
from jax.experimental.pallas import tpu as pltpu


def _round_up(x, m):
    return -(-x // m) * m


def _fused_fft_operators(H, W, hwp, dtype):
    """Fused dense operators for ortho rfft2 / irfft2 on a row-major flattened (H, W) slice.

    Returns:
      kf: (H*W, 2*hwp)  columns = [Re(rfft2) | zero pad | Im(rfft2) | zero pad]
      kb: (2*hwp, H*W)  rows    = [Re part   | zero pad | Im part   | zero pad]
    so that for a flattened slice x (H*W,):
      f = x @ kf           ->  f[:hwp] = Re(rfft2(x)),  f[hwp:] = Im(rfft2(x))
      y = [gre | gim] @ kb ->  irfft2(gre + i*gim)      (flattened (H, W))
    Padded frequency lanes carry exact zeros through the whole linear + gate pipeline.
    """
    Wf = W // 2 + 1
    # DFT along H (ortho): FH[j, m] = exp(-2i*pi*j*m/H)/sqrt(H)  (symmetric).
    jm = np.outer(np.arange(H), np.arange(H)) * (2.0 * np.pi / H)
    A = np.cos(jm) / np.sqrt(H)
    Bm = -np.sin(jm) / np.sqrt(H)
    # rfft along W (ortho): FW[n, k] = exp(-2i*pi*n*k/W)/sqrt(W).
    nk = np.outer(np.arange(W), np.arange(Wf)) * (2.0 * np.pi / W)
    P = np.cos(nk) / np.sqrt(W)
    Q = -np.sin(nk) / np.sqrt(W)
    # Inverse rfft along W (ortho); DC/Nyquist imaginary parts drop out (c2r semantics).
    c = np.full((Wf,), 2.0)
    c[0] = 1.0
    if W % 2 == 0:
        c[-1] = 1.0
    kn = np.outer(np.arange(Wf), np.arange(W)) * (2.0 * np.pi / W)
    Gre = (c[:, None] * np.cos(kn)) / np.sqrt(W)
    Gim = (-c[:, None] * np.sin(kn)) / np.sqrt(W)

    # Fold the separable transform into flattened operators (A, Bm symmetric).
    kf_re = np.kron(A, P) - np.kron(Bm, Q)        # (H*W, H*Wf)
    kf_im = np.kron(A, Q) + np.kron(Bm, P)
    kb_re = np.kron(A, Gre) - np.kron(Bm, Gim)    # (H*Wf, H*W)
    kb_im = np.kron(Bm, Gre) + np.kron(A, Gim)

    pad = hwp - H * Wf
    kf_re = np.pad(kf_re, ((0, 0), (0, pad)))
    kf_im = np.pad(kf_im, ((0, 0), (0, pad)))
    kb_re = np.pad(kb_re, ((0, pad), (0, 0)))
    kb_im = np.pad(kb_im, ((0, pad), (0, 0)))
    kf = np.concatenate([kf_re, kf_im], axis=1)   # (H*W, 2*hwp)
    kb = np.concatenate([kb_re, kb_im], axis=0)   # (2*hwp, H*W)
    return jnp.asarray(kf, dtype), jnp.asarray(kb, dtype)


def _choose_block_rows(n, c, target_rows=256):
    """Rows per grid step: a multiple of lcm(8, C) (sublane alignment + whole channel
    groups so the pre-tiled gate weights line up), targeting 128/256-row blocks for MXU
    M-fill.  Prefers an exact divisor of n; otherwise the row axis gets zero-padded."""
    base = math.lcm(8, c)
    target = _round_up(target_rows, base)
    if n <= target:
        return _round_up(n, base)
    for blk in range(target, base - 1, -base):
        if n % blk == 0:
            return blk
    return target   # no aligned divisor of n: caller pads the row axis instead


def _sgn_kernel(x_ref, w_ref, kf_ref, kb_ref, o_ref, *, hwp):
    f32 = jnp.float32
    # Cast under the DMA; bf16 operands feed the MXU, accumulation stays f32.
    x = x_ref[...].astype(kf_ref.dtype)
    # Forward ortho rfft2 of the whole block: ONE fused lane-dense matmul -> [Re | Im].
    f = jnp.dot(x, kf_ref[...], preferred_element_type=f32)          # (blk, 2*hwp)
    fre, fim = f[:, :hwp], f[:, hwp:]                                # vreg-aligned slices
    # Per-channel complex gate in f32 on the VPU (weights pre-tiled to blk rows outside).
    w = w_ref[...]
    wr, wi = w[:, :hwp], w[:, hwp:]
    gre = fre * wr - fim * wi
    gim = fre * wi + fim * wr
    g = jnp.concatenate([gre, gim], axis=-1).astype(kb_ref.dtype)    # aligned concat
    # Inverse ortho irfft2: ONE fused matmul; output last dim = H*W (lane-dense store).
    o_ref[...] = jnp.dot(g, kb_ref[...], preferred_element_type=f32).astype(o_ref.dtype)


def spectral_gating_network(x, complex_weight, *, block_rows=None,
                            operator_dtype=jnp.bfloat16, out_dtype=jnp.float32):
    """x: (B, C, H, W) any float dtype; complex_weight: (H, W//2+1, C, 2) float32.

    Returns (B, C, H, W) in `out_dtype` (default float32, matching the PyTorch forward).
    """
    Bsz, C, H, W = x.shape
    Wf = W // 2 + 1
    assert complex_weight.shape == (H, Wf, C, 2), complex_weight.shape

    N = Bsz * C
    HW = H * W
    HWf = H * Wf
    HWp = _round_up(HWf, 128)        # per-half padded frequency width (vreg-aligned halves)

    kf, kb = _fused_fft_operators(H, W, HWp, operator_dtype)

    blk = _choose_block_rows(N, C) if block_rows is None else block_rows
    assert blk % C == 0 and blk % 8 == 0, (blk, C)
    Np = _round_up(N, blk)
    grid = (Np // blk,)

    # Gate weights: flatten to the operators' (h_freq, w_freq) column order, pad each half
    # to HWp, concatenate [Re | Im], and pre-tile to the block's rows (outside the grid
    # loop).  Blocks start at multiples of C, so block row r uses channel r % C.
    wr = jnp.transpose(complex_weight[..., 0], (2, 0, 1)).reshape(C, HWf).astype(jnp.float32)
    wi = jnp.transpose(complex_weight[..., 1], (2, 0, 1)).reshape(C, HWf).astype(jnp.float32)
    pad = ((0, 0), (0, HWp - HWf))
    w_cat = jnp.concatenate([jnp.pad(wr, pad), jnp.pad(wi, pad)], axis=1)   # (C, 2*HWp)
    w_tiled = jnp.tile(w_cat, (blk // C, 1))                                 # (blk, 2*HWp)

    # Flatten (B, C) onto one row axis; keep x's dtype (cast happens inside the kernel).
    x_flat = x.reshape(N, HW)
    if Np != N:
        x_flat = jnp.pad(x_flat, ((0, Np - N), (0, 0)))

    # VMEM limit from the real footprint (default double buffering on every operand).
    op_bytes = (HW * 2 * HWp + 2 * HWp * HW) * np.dtype(operator_dtype).itemsize
    stream_bytes = blk * (2 * HWp * 4                          # pre-tiled gate weights (f32)
                          + HW * np.dtype(x.dtype).itemsize    # x block
                          + HW * np.dtype(out_dtype).itemsize)  # out block
    vmem_limit = int(min(64 << 20, 2 * (op_bytes + stream_bytes) + (8 << 20)))

    kernel = functools.partial(_sgn_kernel, hwp=HWp)
    y = pl.pallas_call(
        kernel,
        out_shape=jax.ShapeDtypeStruct((Np, HW), out_dtype),
        grid_spec=pltpu.PrefetchScalarGridSpec(
            num_scalar_prefetch=0,
            grid=grid,
            in_specs=[
                pl.BlockSpec((blk, HW), lambda i: (i, 0)),        # x rows (lane-dense load)
                pl.BlockSpec((blk, 2 * HWp), lambda i: (0, 0)),   # pre-tiled gate weights
                pl.BlockSpec((HW, 2 * HWp), lambda i: (0, 0)),    # fused rfft2 operator
                pl.BlockSpec((2 * HWp, HW), lambda i: (0, 0)),    # fused irfft2 operator
            ],
            out_specs=pl.BlockSpec((blk, HW), lambda i: (i, 0)),  # lane-dense store
        ),
        compiler_params=pltpu.CompilerParams(
            dimension_semantics=("parallel",),
            vmem_limit_bytes=vmem_limit,
        ),
    )(x_flat, w_tiled, kf, kb)

    if Np != N:
        y = y[:N]
    return y.reshape(Bsz, C, H, W)


def _reference(x, complex_weight):
    # Pure-JAX reference mirroring the PyTorch forward exactly.
    x = jnp.transpose(x, (0, 2, 3, 1)).astype(jnp.float32)
    _, H, W, _ = x.shape
    xf = jnp.fft.rfft2(x, axes=(1, 2), norm="ortho")
    w = complex_weight[..., 0] + 1j * complex_weight[..., 1]
    xf = xf * w
    y = jnp.fft.irfft2(xf, s=(H, W), axes=(1, 2), norm="ortho")
    return jnp.transpose(y, (0, 3, 1, 2))


if __name__ == "__main__":
    Bsz, C, H, W = 2, 4, 16, 16
    Wf = W // 2 + 1

    key = jax.random.PRNGKey(0)
    kx, kw = jax.random.split(key)
    x = jax.random.normal(kx, (Bsz, C, H, W), dtype=jnp.float32)
    # Deterministic trunc-normal(std=0.02) init, matching the module's __init__
    # (self.complex_weight has shape (h, w, dim, 2) with h=H, w=W//2+1, dim=C).
    complex_weight = 0.02 * jax.random.truncated_normal(
        kw, -2.0, 2.0, (H, Wf, C, 2), dtype=jnp.float32)

    y = spectral_gating_network(x, complex_weight)
    y = jax.block_until_ready(y)

    y_ref = _reference(x, complex_weight)
    # bf16 MXU operands (per the perf review): expected max abs error is a few 1e-4 at
    # this scale, so the tolerance is loosened from 5e-4 to 1e-3.
    assert jnp.allclose(y, y_ref, atol=1e-3, rtol=1e-3), float(
        jnp.max(jnp.abs(y - y_ref)))

    print("KERNEL_OK")
</pallas_src>

<mosaic_0001>
module attributes {stable_mosaic.version = 11 : i64} {
  func.func @_sgn_kernel(%arg0: i32, %arg1: memref<8x256xf32, #tpu.memory_space<vmem>>, %arg2: memref<8x512xf32, #tpu.memory_space<vmem>>, %arg3: memref<256x512xbf16, #tpu.memory_space<vmem>>, %arg4: memref<512x256xbf16, #tpu.memory_space<vmem>>, %arg5: memref<8x256xf32, #tpu.memory_space<vmem>>) attributes {dimension_semantics = [#tpu.dimension_semantics<parallel>], iteration_bounds = array<i64: 1>, scalar_prefetch = 0 : i64, scratch_operands = 0 : i64, tpu.core_type = #tpu.core_type<tc>, window_params = [{transform_indices = @transform_0, window_bounds = array<i64: 8, 256>}, {pipeline_mode = #tpu.pipeline_mode<synchronous>, transform_indices = @transform_1, window_bounds = array<i64: 8, 512>}, {pipeline_mode = #tpu.pipeline_mode<synchronous>, transform_indices = @transform_2, window_bounds = array<i64: 256, 512>}, {pipeline_mode = #tpu.pipeline_mode<synchronous>, transform_indices = @transform_3, window_bounds = array<i64: 512, 256>}, {transform_indices = @transform_4, window_bounds = array<i64: 8, 256>}]} {
    %c0 = arith.constant 0 : index
    %c0_0 = arith.constant 0 : index
    %0 = vector.load %arg1[%c0, %c0_0] : memref<8x256xf32, #tpu.memory_space<vmem>>, vector<8x256xf32>
    %1 = arith.truncf %0 : vector<8x256xf32> to vector<8x256xbf16>
    %c0_1 = arith.constant 0 : index
    %c0_2 = arith.constant 0 : index
    %2 = vector.load %arg3[%c0_1, %c0_2] : memref<256x512xbf16, #tpu.memory_space<vmem>>, vector<256x512xbf16>
    %cst = arith.constant dense<0.000000e+00> : vector<8x512xf32>
    %3 = tpu.matmul %1, %2, %cst {dimension_numbers = #tpu.dot_dimension_numbers<[1], [0], [0], [1], [0, 0, 1, 1], [], []>} : vector<8x256xbf16>, vector<256x512xbf16>, vector<8x512xf32> -> vector<8x512xf32>
    %4 = vector.extract_strided_slice %3 {offsets = [0, 0], sizes = [8, 256], strides = [1, 1]} : vector<8x512xf32> to vector<8x256xf32>
    %5 = vector.extract_strided_slice %3 {offsets = [0, 256], sizes = [8, 256], strides = [1, 1]} : vector<8x512xf32> to vector<8x256xf32>
    %c0_3 = arith.constant 0 : index
    %c0_4 = arith.constant 0 : index
    %6 = vector.load %arg2[%c0_3, %c0_4] : memref<8x512xf32, #tpu.memory_space<vmem>>, vector<8x512xf32>
    %7 = vector.extract_strided_slice %6 {offsets = [0, 0], sizes = [8, 256], strides = [1, 1]} : vector<8x512xf32> to vector<8x256xf32>
    %8 = vector.extract_strided_slice %6 {offsets = [0, 256], sizes = [8, 256], strides = [1, 1]} : vector<8x512xf32> to vector<8x256xf32>
    %9 = arith.mulf %4, %7 : vector<8x256xf32>
    %10 = arith.mulf %5, %8 : vector<8x256xf32>
    %11 = arith.subf %9, %10 : vector<8x256xf32>
    %12 = arith.mulf %4, %8 : vector<8x256xf32>
    %13 = arith.mulf %5, %7 : vector<8x256xf32>
    %14 = arith.addf %12, %13 : vector<8x256xf32>
    %15 = tpu.concatenate %11, %14 in 1 : vector<8x256xf32>, vector<8x256xf32> -> vector<8x512xf32>
    %16 = arith.truncf %15 : vector<8x512xf32> to vector<8x512xbf16>
    %c0_5 = arith.constant 0 : index
    %c0_6 = arith.constant 0 : index
    %17 = vector.load %arg4[%c0_5, %c0_6] : memref<512x256xbf16, #tpu.memory_space<vmem>>, vector<512x256xbf16>
    %cst_7 = arith.constant dense<0.000000e+00> : vector<8x256xf32>
    %18 = tpu.matmul %16, %17, %cst_7 {dimension_numbers = #tpu.dot_dimension_numbers<[1], [0], [0], [1], [0, 0, 1, 1], [], []>} : vector<8x512xbf16>, vector<512x256xbf16>, vector<8x256xf32> -> vector<8x256xf32>
    %c0_8 = arith.constant 0 : index
    %c0_9 = arith.constant 0 : index
    %19 = vector.load %arg5[%c0_8, %c0_9] : memref<8x256xf32, #tpu.memory_space<vmem>>, vector<8x256xf32>
    tpu.vector_store %arg5[%c0_8, %c0_9], %18 {strides = array<i32>} : memref<8x256xf32, #tpu.memory_space<vmem>>, vector<8x256xf32>,
    return
  }
  func.func @transform_0(%arg0: i32) -> (i32, i32) {
    %c0_i32 = arith.constant 0 : i32
    %c0_i32_0 = arith.constant 0 : i32
    return %arg0, %c0_i32 : i32, i32
  }
  func.func @transform_1(%arg0: i32) -> (i32, i32) {
    %c0_i32 = arith.constant 0 : i32
    %c0_i32_0 = arith.constant 0 : i32
    %c0_i32_1 = arith.constant 0 : i32
    return %c0_i32, %c0_i32_0 : i32, i32
  }
  func.func @transform_2(%arg0: i32) -> (i32, i32) {
    %c0_i32 = arith.constant 0 : i32
    %c0_i32_0 = arith.constant 0 : i32
    %c0_i32_1 = arith.constant 0 : i32
    return %c0_i32, %c0_i32_0 : i32, i32
  }
  func.func @transform_3(%arg0: i32) -> (i32, i32) {
    %c0_i32 = arith.constant 0 : i32
    %c0_i32_0 = arith.constant 0 : i32
    %c0_i32_1 = arith.constant 0 : i32
    return %c0_i32, %c0_i32_0 : i32, i32
  }
  func.func @transform_4(%arg0: i32) -> (i32, i32) {
    %c0_i32 = arith.constant 0 : i32
    %c0_i32_0 = arith.constant 0 : i32
    return %arg0, %c0_i32 : i32, i32
  }
}

</mosaic_0001>

<llo_original>
// kernel: tpu_custom_call.1
$region0: #{tpu_custom_call.1}
  #allocation0 [shape = 'u32[]', space=smem, size = 0x4, offset = 0x4, fixed_abs, tag = 'smem constant byte address 0x4 - core index']
  #allocation1 [shape = 'u32[144,128]{1,0:T(1,128)}', space=vmem, size = 0x12000, scoped, tag = 'internal scratch']
  %s0 = inlined_call_operand.hbm [shape: f32[8,256], index: 0, kind: input, shape index: {}]
  %s1 = inlined_call_operand.hbm [shape: f32[8,512], index: 1, kind: input, shape index: {}]
  %s2 = inlined_call_operand.hbm [shape: bf16[256,512], index: 2, kind: input, shape index: {}]
  %s3 = inlined_call_operand.hbm [shape: bf16[512,256], index: 3, kind: input, shape index: {}]
  %s4 = inlined_call_operand.hbm [shape: f32[8,256], index: 4, kind: output, shape index: {}]
  %s5 = sld [smem:[#allocation0]]
  $region42: #{tpu_custom_call.1} parent=0
    _
  %s7 = ssub.s32 1, %s5
  %s8 = scalar_select 0, %s7, %s5
  $region1: #{tpu_custom_call.1} parent=0
    #allocation2 [shape = 'u8[8192]{0}', space=vmem, size = 0x2000, scoped, tag = 'input window, operand 0, single buffered']
    #allocation3 [shape = 's32[1]{0}', space=sflag, size = 0x4, scoped, tag = 'scoped memory for tpu_custom_call.1']
    #allocation4 [shape = 's32[1]{0}', space=sflag, size = 0x4, scoped, tag = 'scoped memory for tpu_custom_call.1']
    #allocation5 [shape = 'u8[16384]{0}', space=vmem, size = 0x4000, scoped, tag = 'input window, operand 1, single buffered']
    #allocation6 [shape = 's32[1]{0}', space=sflag, size = 0x4, scoped, tag = 'scoped memory for tpu_custom_call.1']
    #allocation7 [shape = 'u8[262144]{0}', space=vmem, size = 0x40000, scoped, tag = 'input window, operand 2, single buffered']
    #allocation8 [shape = 'u8[262144]{0}', space=vmem, size = 0x40000, scoped, tag = 'input window, operand 3, single buffered']
    #allocation9 [shape = 's32[1]{0}', space=sflag, size = 0x4, scoped, tag = 'scoped memory for tpu_custom_call.1']
    #allocation10 [shape = 'u8[8192]{0}', space=vmem, size = 0x2000, scoped, tag = 'output window, operand 0, single buffered']
    %9 = vsyncpa [#allocation3], 0
    %10 = vsyncpa [#allocation6], 0
    %11 = vsyncpa [#allocation9], 0
    %12 = vsyncpa [#allocation4], 0
    // Predicated region
    $region2: #{tpu_custom_call.1} parent=1 // pred_check
      _
    $region3: #{tpu_custom_call.1} parent=1 // pred_check_branch
      %14 = sbr.rel (0) target = $region5
    $region4: #{tpu_custom_call.1} parent=1 // pred_region
      %s16 = ssub.s32 256, 256
      %17 = vsyncadd [#allocation3], %s16
      %s19 = sshll.u32 [#allocation2], 4
      %s20 = int_to_ptr.vmem [resolvable:$true] %s19
      %22 = dma.hbm_to_vmem [thread:$0]  %s0, 256, %s20, [#allocation3]
    $region5: #{tpu_custom_call.1} parent=1 // pred_fallthru
      _
    // Predicated region
    $region6: #{tpu_custom_call.1} parent=1 // pred_check
      _
    $region7: #{tpu_custom_call.1} parent=1 // pred_check_branch
      %24 = sbr.rel (0) target = $region9
    $region8: #{tpu_custom_call.1} parent=1 // pred_region
      %s26 = ssub.s32 512, 512
      %27 = vsyncadd [#allocation6], %s26
      %s29 = sshll.u32 [#allocation5], 4
      %s30 = int_to_ptr.vmem [resolvable:$true] %s29
      %32 = dma.hbm_to_vmem [thread:$0]  %s1, 512, %s30, [#allocation6]
    $region9: #{tpu_custom_call.1} parent=1 // pred_fallthru
      _
    // Predicated region
    $region10: #{tpu_custom_call.1} parent=1 // pred_check
      _
    $region11: #{tpu_custom_call.1} parent=1 // pred_check_branch
      %34 = sbr.rel (0) target = $region13
    $region12: #{tpu_custom_call.1} parent=1 // pred_region
      %s36 = ssub.s32 8192, 8192
      %37 = vsyncadd [#allocation6], %s36
      %s38 = sshll.u32 [#allocation7], 4
      %s39 = int_to_ptr.vmem [resolvable:$true] %s38
      %44 = dma.hbm_to_vmem [thread:$0]  %s2, 8192, %s39, [#allocation6], 256, 256, 16
    $region13: #{tpu_custom_call.1} parent=1 // pred_fallthru
      _
    // Predicated region
    $region14: #{tpu_custom_call.1} parent=1 // pred_check
      _
    $region15: #{tpu_custom_call.1} parent=1 // pred_check_branch
      %46 = sbr.rel (0) target = $region17
    $region16: #{tpu_custom_call.1} parent=1 // pred_region
      %s48 = ssub.s32 8192, 8192
      %49 = vsyncadd [#allocation9], %s48
      %s50 = sshll.u32 [#allocation8], 4
      %s51 = int_to_ptr.vmem [resolvable:$true] %s50
      %56 = dma.hbm_to_vmem [thread:$0]  %s3, 8192, %s51, [#allocation9], 128, 128, 8
    $region17: #{tpu_custom_call.1} parent=1 // pred_fallthru
      _
    // Predicated region
    $region18: #{tpu_custom_call.1} parent=1 // pred_check
      _
    $region19: #{tpu_custom_call.1} parent=1 // pred_check_branch
      %58 = sbr.rel (0) target = $region21
    $region20: #{tpu_custom_call.1} parent=1 // pred_region
      %59 = dma.done [#allocation3], 256
    $region21: #{tpu_custom_call.1} parent=1 // pred_fallthru
      _
    // Predicated region
    $region22: #{tpu_custom_call.1} parent=1 // pred_check
      _
    $region23: #{tpu_custom_call.1} parent=1 // pred_check_branch
      %61 = sbr.rel (0) target = $region25
    $region24: #{tpu_custom_call.1} parent=1 // pred_region
      %62 = dma.done [#allocation6], 512
    $region25: #{tpu_custom_call.1} parent=1 // pred_fallthru
      _
    // Predicated region
    $region26: #{tpu_custom_call.1} parent=1 // pred_check
      _
    $region27: #{tpu_custom_call.1} parent=1 // pred_check_branch
      %64 = sbr.rel (0) target = $region29
    $region28: #{tpu_custom_call.1} parent=1 // pred_region
      %65 = dma.done [#allocation6], 8192
    $region29: #{tpu_custom_call.1} parent=1 // pred_fallthru
      _
    // Predicated region
    $region30: #{tpu_custom_call.1} parent=1 // pred_check
      _
    $region31: #{tpu_custom_call.1} parent=1 // pred_check_branch
      %67 = sbr.rel (0) target = $region33
    $region32: #{tpu_custom_call.1} parent=1 // pred_region
      %68 = dma.done [#allocation9], 8192
    $region33: #{tpu_custom_call.1} parent=1 // pred_fallthru
      _
    %v69 = vld [vmem:[#allocation2] sm:$0xff]
    %v70 = vld [vmem:[#allocation2 + $0x8] sm:$0xff]
    %v71 = vpack.c.bf16 %v69, %v69
    %v72 = vpack.c.bf16 %v70, %v70
    %v73 = vld [vmem:[#allocation7] sm:$0xff]
    %v74 = vld [vmem:[#allocation7 + $0x8] sm:$0xff]
    %v75 = vld [vmem:[#allocation7 + $0x10] sm:$0xff]
    %v76 = vld [vmem:[#allocation7 + $0x18] sm:$0xff]
    %v77 = vld [vmem:[#allocation7 + $0x20] sm:$0xff]
    %v78 = vld [vmem:[#allocation7 + $0x28] sm:$0xff]
    %v79 = vld [vmem:[#allocation7 + $0x30] sm:$0xff]
    %v80 = vld [vmem:[#allocation7 + $0x38] sm:$0xff]
    %v81 = vld [vmem:[#allocation7 + $0x40] sm:$0xff]
    %v82 = vld [vmem:[#allocation7 + $0x48] sm:$0xff]
    %v83 = vld [vmem:[#allocation7 + $0x50] sm:$0xff]
    %v84 = vld [vmem:[#allocation7 + $0x58] sm:$0xff]
    %v85 = vld [vmem:[#allocation7 + $0x60] sm:$0xff]
    %v86 = vld [vmem:[#allocation7 + $0x68] sm:$0xff]
    %v87 = vld [vmem:[#allocation7 + $0x70] sm:$0xff]
    %v88 = vld [vmem:[#allocation7 + $0x78] sm:$0xff]
    %v89 = vld [vmem:[#allocation7 + $0x80] sm:$0xff]
    %v90 = vld [vmem:[#allocation7 + $0x88] sm:$0xff]
    %v91 = vld [vmem:[#allocation7 + $0x90] sm:$0xff]
    %v92 = vld [vmem:[#allocation7 + $0x98] sm:$0xff]
    %v93 = vld [vmem:[#allocation7 + $0xa0] sm:$0xff]
    %v94 = vld [vmem:[#allocation7 + $0xa8] sm:$0xff]
    %v95 = vld [vmem:[#allocation7 + $0xb0] sm:$0xff]
    %v96 = vld [vmem:[#allocation7 + $0xb8] sm:$0xff]
    %v97 = vld [vmem:[#allocation7 + $0xc0] sm:$0xff]
    %v98 = vld [vmem:[#allocation7 + $0xc8] sm:$0xff]
    %v99 = vld [vmem:[#allocation7 + $0xd0] sm:$0xff]
    %v100 = vld [vmem:[#allocation7 + $0xd8] sm:$0xff]
    %v101 = vld [vmem:[#allocation7 + $0xe0] sm:$0xff]
    %v102 = vld [vmem:[#allocation7 + $0xe8] sm:$0xff]
    %v103 = vld [vmem:[#allocation7 + $0xf0] sm:$0xff]
    %v104 = vld [vmem:[#allocation7 + $0xf8] sm:$0xff]
    %v105 = vld [vmem:[#allocation7 + $0x100] sm:$0xff]
    %v106 = vld [vmem:[#allocation7 + $0x108] sm:$0xff]
    %v107 = vld [vmem:[#allocation7 + $0x110] sm:$0xff]
    %v108 = vld [vmem:[#allocation7 + $0x118] sm:$0xff]
    %v109 = vld [vmem:[#allocation7 + $0x120] sm:$0xff]
    %v110 = vld [vmem:[#allocation7 + $0x128] sm:$0xff]
    %v111 = vld [vmem:[#allocation7 + $0x130] sm:$0xff]
    %v112 = vld [vmem:[#allocation7 + $0x138] sm:$0xff]
    %v113 = vld [vmem:[#allocation7 + $0x140] sm:$0xff]
    %v114 = vld [vmem:[#allocation7 + $0x148] sm:$0xff]
    %v115 = vld [vmem:[#allocation7 + $0x150] sm:$0xff]
    %v116 = vld [vmem:[#allocation7 + $0x158] sm:$0xff]
    %v117 = vld [vmem:[#allocation7 + $0x160] sm:$0xff]
    %v118 = vld [vmem:[#allocation7 + $0x168] sm:$0xff]
    %v119 = vld [vmem:[#allocation7 + $0x170] sm:$0xff]
    %v120 = vld [vmem:[#allocation7 + $0x178] sm:$0xff]
    %v121 = vld [vmem:[#allocation7 + $0x180] sm:$0xff]
    %v122 = vld [vmem:[#allocation7 + $0x188] sm:$0xff]
    %v123 = vld [vmem:[#allocation7 + $0x190] sm:$0xff]
    %v124 = vld [vmem:[#allocation7 + $0x198] sm:$0xff]
    %v125 = vld [vmem:[#allocation7 + $0x1a0] sm:$0xff]
    %v126 = vld [vmem:[#allocation7 + $0x1a8] sm:$0xff]
    %v127 = vld [vmem:[#allocation7 + $0x1b0] sm:$0xff]
    %v128 = vld [vmem:[#allocation7 + $0x1b8] sm:$0xff]
    %v129 = vld [vmem:[#allocation7 + $0x1c0] sm:$0xff]
    %v130 = vld [vmem:[#allocation7 + $0x1c8] sm:$0xff]
    %v131 = vld [vmem:[#allocation7 + $0x1d0] sm:$0xff]
    %v132 = vld [vmem:[#allocation7 + $0x1d8] sm:$0xff]
    %v133 = vld [vmem:[#allocation7 + $0x1e0] sm:$0xff]
    %v134 = vld [vmem:[#allocation7 + $0x1e8] sm:$0xff]
    %v135 = vld [vmem:[#allocation7 + $0x1f0] sm:$0xff]
    %v136 = vld [vmem:[#allocation7 + $0x1f8] sm:$0xff]
    %v201 = vunpack.c.l.b16 %v73
    %v202 = vunpack.c.h.b16 %v73
    %v203 = vunpack.c.l.b16 %v74
    %v204 = vunpack.c.h.b16 %v74
    %v205 = vunpack.c.l.b16 %v75
    %v206 = vunpack.c.h.b16 %v75
    %v207 = vunpack.c.l.b16 %v76
    %v208 = vunpack.c.h.b16 %v76
    %v209 = vunpack.c.l.b16 %v77
    %v210 = vunpack.c.h.b16 %v77
    %v211 = vunpack.c.l.b16 %v78
    %v212 = vunpack.c.h.b16 %v78
    %v213 = vunpack.c.l.b16 %v79
    %v214 = vunpack.c.h.b16 %v79
    %v215 = vunpack.c.l.b16 %v80
    %v216 = vunpack.c.h.b16 %v80
    %v217 = vunpack.c.l.b16 %v81
    %v218 = vunpack.c.h.b16 %v81
    %v219 = vunpack.c.l.b16 %v82
    %v220 = vunpack.c.h.b16 %v82
    %v221 = vunpack.c.l.b16 %v83
    %v222 = vunpack.c.h.b16 %v83
    %v223 = vunpack.c.l.b16 %v84
    %v224 = vunpack.c.h.b16 %v84
    %v225 = vunpack.c.l.b16 %v85
    %v226 = vunpack.c.h.b16 %v85
    %v227 = vunpack.c.l.b16 %v86
    %v228 = vunpack.c.h.b16 %v86
    %v229 = vunpack.c.l.b16 %v87
    %v230 = vunpack.c.h.b16 %v87
    %v231 = vunpack.c.l.b16 %v88
    %v232 = vunpack.c.h.b16 %v88
    %v233 = vunpack.c.l.b16 %v89
    %v234 = vunpack.c.h.b16 %v89
    %v235 = vunpack.c.l.b16 %v90
    %v236 = vunpack.c.h.b16 %v90
    %v237 = vunpack.c.l.b16 %v91
    %v238 = vunpack.c.h.b16 %v91
    %v239 = vunpack.c.l.b16 %v92
    %v240 = vunpack.c.h.b16 %v92
    %v241 = vunpack.c.l.b16 %v93
    %v242 = vunpack.c.h.b16 %v93
    %v243 = vunpack.c.l.b16 %v94
    %v244 = vunpack.c.h.b16 %v94
    %v245 = vunpack.c.l.b16 %v95
    %v246 = vunpack.c.h.b16 %v95
    %v247 = vunpack.c.l.b16 %v96
    %v248 = vunpack.c.h.b16 %v96
    %v249 = vunpack.c.l.b16 %v97
    %v250 = vunpack.c.h.b16 %v97
    %v251 = vunpack.c.l.b16 %v98
    %v252 = vunpack.c.h.b16 %v98
    %v253 = vunpack.c.l.b16 %v99
    %v254 = vunpack.c.h.b16 %v99
    %v255 = vunpack.c.l.b16 %v100
    %v256 = vunpack.c.h.b16 %v100
    %v257 = vunpack.c.l.b16 %v101
    %v258 = vunpack.c.h.b16 %v101
    %v259 = vunpack.c.l.b16 %v102
    %v260 = vunpack.c.h.b16 %v102
    %v261 = vunpack.c.l.b16 %v103
    %v262 = vunpack.c.h.b16 %v103
    %v263 = vunpack.c.l.b16 %v104
    %v264 = vunpack.c.h.b16 %v104
    %v265 = vunpack.c.l.b16 %v105
    %v266 = vunpack.c.h.b16 %v105
    %v267 = vunpack.c.l.b16 %v106
    %v268 = vunpack.c.h.b16 %v106
    %v269 = vunpack.c.l.b16 %v107
    %v270 = vunpack.c.h.b16 %v107
    %v271 = vunpack.c.l.b16 %v108
    %v272 = vunpack.c.h.b16 %v108
    %v273 = vunpack.c.l.b16 %v109
    %v274 = vunpack.c.h.b16 %v109
    %v275 = vunpack.c.l.b16 %v110
    %v276 = vunpack.c.h.b16 %v110
    %v277 = vunpack.c.l.b16 %v111
    %v278 = vunpack.c.h.b16 %v111
    %v279 = vunpack.c.l.b16 %v112
    %v280 = vunpack.c.h.b16 %v112
    %v281 = vunpack.c.l.b16 %v113
    %v282 = vunpack.c.h.b16 %v113
    %v283 = vunpack.c.l.b16 %v114
    %v284 = vunpack.c.h.b16 %v114
    %v285 = vunpack.c.l.b16 %v115
    %v286 = vunpack.c.h.b16 %v115
    %v287 = vunpack.c.l.b16 %v116
    %v288 = vunpack.c.h.b16 %v116
    %v289 = vunpack.c.l.b16 %v117
    %v290 = vunpack.c.h.b16 %v117
    %v291 = vunpack.c.l.b16 %v118
    %v292 = vunpack.c.h.b16 %v118
    %v293 = vunpack.c.l.b16 %v119
    %v294 = vunpack.c.h.b16 %v119
    %v295 = vunpack.c.l.b16 %v120
    %v296 = vunpack.c.h.b16 %v120
    %v297 = vunpack.c.l.b16 %v121
    %v298 = vunpack.c.h.b16 %v121
    %v299 = vunpack.c.l.b16 %v122
    %v300 = vunpack.c.h.b16 %v122
    %v301 = vunpack.c.l.b16 %v123
    %v302 = vunpack.c.h.b16 %v123
    %v303 = vunpack.c.l.b16 %v124
    %v304 = vunpack.c.h.b16 %v124
    %v305 = vunpack.c.l.b16 %v125
    %v306 = vunpack.c.h.b16 %v125
    %v307 = vunpack.c.l.b16 %v126
    %v308 = vunpack.c.h.b16 %v126
    %v309 = vunpack.c.l.b16 %v127
    %v310 = vunpack.c.h.b16 %v127
    %v311 = vunpack.c.l.b16 %v128
    %v312 = vunpack.c.h.b16 %v128
    %v313 = vunpack.c.l.b16 %v129
    %v314 = vunpack.c.h.b16 %v129
    %v315 = vunpack.c.l.b16 %v130
    %v316 = vunpack.c.h.b16 %v130
    %v317 = vunpack.c.l.b16 %v131
    %v318 = vunpack.c.h.b16 %v131
    %v319 = vunpack.c.l.b16 %v132
    %v320 = vunpack.c.h.b16 %v132
    %v321 = vunpack.c.l.b16 %v133
    %v322 = vunpack.c.h.b16 %v133
    %v323 = vunpack.c.l.b16 %v134
    %v324 = vunpack.c.h.b16 %v134
    %v325 = vunpack.c.l.b16 %v135
    %v326 = vunpack.c.h.b16 %v135
    %v327 = vunpack.c.l.b16 %v136
    %v328 = vunpack.c.h.b16 %v136
    %v329 = vpack.c.b16 %v205, %v201
    %v330 = vpack.c.b16 %v206, %v202
    %v331 = vpack.c.b16 %v207, %v203
    %v332 = vpack.c.b16 %v208, %v204
    %v333 = vpack.c.b16 %v213, %v209
    %v334 = vpack.c.b16 %v214, %v210
    %v335 = vpack.c.b16 %v215, %v211
    %v336 = vpack.c.b16 %v216, %v212
    %v337 = vpack.c.b16 %v221, %v217
    %v338 = vpack.c.b16 %v222, %v218
    %v339 = vpack.c.b16 %v223, %v219
    %v340 = vpack.c.b16 %v224, %v220
    %v341 = vpack.c.b16 %v229, %v225
    %v342 = vpack.c.b16 %v230, %v226
    %v343 = vpack.c.b16 %v231, %v227
    %v344 = vpack.c.b16 %v232, %v228
    %v345 = vpack.c.b16 %v237, %v233
    %v346 = vpack.c.b16 %v238, %v234
    %v347 = vpack.c.b16 %v239, %v235
    %v348 = vpack.c.b16 %v240, %v236
    %v349 = vpack.c.b16 %v245, %v241
    %v350 = vpack.c.b16 %v246, %v242
    %v351 = vpack.c.b16 %v247, %v243
    %v352 = vpack.c.b16 %v248, %v244
    %v353 = vpack.c.b16 %v253, %v249
    %v354 = vpack.c.b16 %v254, %v250
    %v355 = vpack.c.b16 %v255, %v251
    %v356 = vpack.c.b16 %v256, %v252
    %v357 = vpack.c.b16 %v261, %v257
    %v358 = vpack.c.b16 %v262, %v258
    %v359 = vpack.c.b16 %v263, %v259
    %v360 = vpack.c.b16 %v264, %v260
    %v361 = vpack.c.b16 %v269, %v265
    %v362 = vpack.c.b16 %v270, %v266
    %v363 = vpack.c.b16 %v271, %v267
    %v364 = vpack.c.b16 %v272, %v268
    %v365 = vpack.c.b16 %v277, %v273
    %v366 = vpack.c.b16 %v278, %v274
    %v367 = vpack.c.b16 %v279, %v275
    %v368 = vpack.c.b16 %v280, %v276
    %v369 = vpack.c.b16 %v285, %v281
    %v370 = vpack.c.b16 %v286, %v282
    %v371 = vpack.c.b16 %v287, %v283
    %v372 = vpack.c.b16 %v288, %v284
    %v373 = vpack.c.b16 %v293, %v289
    %v374 = vpack.c.b16 %v294, %v290
    %v375 = vpack.c.b16 %v295, %v291
    %v376 = vpack.c.b16 %v296, %v292
    %v377 = vpack.c.b16 %v301, %v297
    %v378 = vpack.c.b16 %v302, %v298
    %v379 = vpack.c.b16 %v303, %v299
    %v380 = vpack.c.b16 %v304, %v300
    %v381 = vpack.c.b16 %v309, %v305
    %v382 = vpack.c.b16 %v310, %v306
    %v383 = vpack.c.b16 %v311, %v307
    %v384 = vpack.c.b16 %v312, %v308
    %v385 = vpack.c.b16 %v317, %v313
    %v386 = vpack.c.b16 %v318, %v314
    %v387 = vpack.c.b16 %v319, %v315
    %v388 = vpack.c.b16 %v320, %v316
    %v389 = vpack.c.b16 %v325, %v321
    %v390 = vpack.c.b16 %v326, %v322
    %v391 = vpack.c.b16 %v327, %v323
    %v392 = vpack.c.b16 %v328, %v324
    %457 = vmatprep.subr.bf16.mxu0 %v358
    %458 = vmatpush1.bf16.msra.mxu0 %v357
    %459 = vmatprep.subr.bf16.mxu0 %v354
    %460 = vmatpush1.bf16.msra.mxu0 %v353
    %461 = vmatprep.subr.bf16.mxu0 %v350
    %462 = vmatpush1.bf16.msra.mxu0 %v349
    %463 = vmatprep.subr.bf16.mxu0 %v346
    %464 = vmatpush1.bf16.msra.mxu0 %v345
    %465 = vmatprep.subr.bf16.mxu0 %v342
    %466 = vmatpush1.bf16.msra.mxu0 %v341
    %467 = vmatprep.subr.bf16.mxu0 %v338
    %468 = vmatpush1.bf16.msra.mxu0 %v337
    %469 = vmatprep.subr.bf16.mxu0 %v334
    %470 = vmatpush1.bf16.msra.mxu0 %v333
    %471 = vmatprep.subr.bf16.mxu0 %v330
    %472 = vmatpush1.bf16.msra.mxu0 %v329
    %473 = vmatprep.subr.bf16.mxu0 %v390
    %474 = vmatpush2.bf16.msra.mxu0 %v389
    %475 = vmatprep.subr.bf16.mxu0 %v386
    %476 = vmatpush2.bf16.msra.mxu0 %v385
    %477 = vmatprep.subr.bf16.mxu0 %v382
    %478 = vmatpush2.bf16.msra.mxu0 %v381
    %479 = vmatprep.subr.bf16.mxu0 %v378
    %480 = vmatpush2.bf16.msra.mxu0 %v377
    %481 = vmatprep.subr.bf16.mxu0 %v374
    %482 = vmatpush2.bf16.msra.mxu0 %v373
    %483 = vmatprep.subr.bf16.mxu0 %v370
    %484 = vmatpush2.bf16.msra.mxu0 %v369
    %485 = vmatprep.subr.bf16.mxu0 %v366
    %486 = vmatpush2.bf16.msra.mxu0 %v365
    %487 = vmatprep.subr.bf16.mxu0 %v362
    %488 = vmatpush2.bf16.msra.mxu0 %v361
    %489 = vmatprep.mubr.bf16.mxu0 %v72
    %490 = vmatmul.mubr.bf16.gmra.mxu0 %v71
    %v491 = vpop.f32.mrf.mxu0
    %v492 = vadd.f32 0.0, %v491
    %v493 = vpop.f32.mrf.mxu0
    %v494 = vadd.f32 0.0, %v493
    %v495 = vpop.f32.mrf.mxu0
    %v496 = vpop.f32.mrf.mxu0
    %497 = vdwg.mxu0
    %498 = vmatprep.subr.bf16.mxu0 %v360
    %499 = vmatpush1.bf16.msra.mxu0 %v359
    %500 = vmatprep.subr.bf16.mxu0 %v356
    %501 = vmatpush1.bf16.msra.mxu0 %v355
    %502 = vmatprep.subr.bf16.mxu0 %v352
    %503 = vmatpush1.bf16.msra.mxu0 %v351
    %504 = vmatprep.subr.bf16.mxu0 %v348
    %505 = vmatpush1.bf16.msra.mxu0 %v347
    %506 = vmatprep.subr.bf16.mxu0 %v344
    %507 = vmatpush1.bf16.msra.mxu0 %v343
    %508 = vmatprep.subr.bf16.mxu0 %v340
    %509 = vmatpush1.bf16.msra.mxu0 %v339
    %510 = vmatprep.subr.bf16.mxu0 %v336
    %511 = vmatpush1.bf16.msra.mxu0 %v335
    %512 = vmatprep.subr.bf16.mxu0 %v332
    %513 = vmatpush1.bf16.msra.mxu0 %v331
    %514 = vmatprep.subr.bf16.mxu0 %v392
    %515 = vmatpush2.bf16.msra.mxu0 %v391
    %516 = vmatprep.subr.bf16.mxu0 %v388
    %517 = vmatpush2.bf16.msra.mxu0 %v387
    %518 = vmatprep.subr.bf16.mxu0 %v384
    %519 = vmatpush2.bf16.msra.mxu0 %v383
    %520 = vmatprep.subr.bf16.mxu0 %v380
    %521 = vmatpush2.bf16.msra.mxu0 %v379
    %522 = vmatprep.subr.bf16.mxu0 %v376
    %523 = vmatpush2.bf16.msra.mxu0 %v375
    %524 = vmatprep.subr.bf16.mxu0 %v372
    %525 = vmatpush2.bf16.msra.mxu0 %v371
    %526 = vmatprep.subr.bf16.mxu0 %v368
    %527 = vmatpush2.bf16.msra.mxu0 %v367
    %528 = vmatprep.subr.bf16.mxu0 %v364
    %529 = vmatpush2.bf16.msra.mxu0 %v363
    %530 = vmatprep.mubr.bf16.mxu0 %v72
    %531 = vmatmul.mubr.bf16.gmra.mxu0 %v71
    %v532 = vpop.f32.mrf.mxu0
    %v533 = vadd.f32 0.0, %v532
    %v534 = vpop.f32.mrf.mxu0
    %v535 = vadd.f32 0.0, %v534
    %v536 = vpop.f32.mrf.mxu0
    %v537 = vpop.f32.mrf.mxu0
    %538 = vdwg.mxu0
    %v539 = vld [vmem:[#allocation5] sm:$0xff]
    %v540 = vld [vmem:[#allocation5 + $0x8] sm:$0xff]
    %v541 = vld [vmem:[#allocation5 + $0x10] sm:$0xff]
    %v542 = vld [vmem:[#allocation5 + $0x18] sm:$0xff]
    %v543 = vmul.f32 %v492, %v539
    %v544 = vmul.f32 %v494, %v540
    %v545 = vmul.f32 %v533, %v541
    %v546 = vmul.f32 %v535, %v542
    %v547 = vsub.f32 %v543, %v545
    %v548 = vsub.f32 %v544, %v546
    %v549 = vmul.f32 %v492, %v541
    %v550 = vmul.f32 %v494, %v542
    %v551 = vmul.f32 %v533, %v539
    %v552 = vmul.f32 %v535, %v540
    %v553 = vadd.f32 %v549, %v551
    %v554 = vadd.f32 %v550, %v552
    %v555 = vpack.c.bf16 %v547, %v547
    %v556 = vpack.c.bf16 %v548, %v548
    %v557 = vpack.c.bf16 %v553, %v553
    %v558 = vpack.c.bf16 %v554, %v554
    %v559 = vld [vmem:[#allocation8] sm:$0xff]
    %v560 = vld [vmem:[#allocation8 + $0x8] sm:$0xff]
    %v561 = vld [vmem:[#allocation8 + $0x10] sm:$0xff]
    %v562 = vld [vmem:[#allocation8 + $0x18] sm:$0xff]
    %v563 = vld [vmem:[#allocation8 + $0x20] sm:$0xff]
    %v564 = vld [vmem:[#allocation8 + $0x28] sm:$0xff]
    %v565 = vld [vmem:[#allocation8 + $0x30] sm:$0xff]
    %v566 = vld [vmem:[#allocation8 + $0x38] sm:$0xff]
    %v567 = vld [vmem:[#allocation8 + $0x40] sm:$0xff]
    %v568 = vld [vmem:[#allocation8 + $0x48] sm:$0xff]
    %v569 = vld [vmem:[#allocation8 + $0x50] sm:$0xff]
    %v570 = vld [vmem:[#allocation8 + $0x58] sm:$0xff]
    %v571 = vld [vmem:[#allocation8 + $0x60] sm:$0xff]
    %v572 = vld [vmem:[#allocation8 + $0x68] sm:$0xff]
    %v573 = vld [vmem:[#allocation8 + $0x70] sm:$0xff]
    %v574 = vld [vmem:[#allocation8 + $0x78] sm:$0xff]
    %v575 = vld [vmem:[#allocation8 + $0x80] sm:$0xff]
    %v576 = vld [vmem:[#allocation8 + $0x88] sm:$0xff]
    %v577 = vld [vmem:[#allocation8 + $0x90] sm:$0xff]
    %v578 = vld [vmem:[#allocation8 + $0x98] sm:$0xff]
    %v579 = vld [vmem:[#allocation8 + $0xa0] sm:$0xff]
    %v580 = vld [vmem:[#allocation8 + $0xa8] sm:$0xff]
    %v581 = vld [vmem:[#allocation8 + $0xb0] sm:$0xff]
    %v582 = vld [vmem:[#allocation8 + $0xb8] sm:$0xff]
    %v583 = vld [vmem:[#allocation8 + $0xc0] sm:$0xff]
    %v584 = vld [vmem:[#allocation8 + $0xc8] sm:$0xff]
    %v585 = vld [vmem:[#allocation8 + $0xd0] sm:$0xff]
    %v586 = vld [vmem:[#allocation8 + $0xd8] sm:$0xff]
    %v587 = vld [vmem:[#allocation8 + $0xe0] sm:$0xff]
    %v588 = vld [vmem:[#allocation8 + $0xe8] sm:$0xff]
    %v589 = vld [vmem:[#allocation8 + $0xf0] sm:$0xff]
    %v590 = vld [vmem:[#allocation8 + $0xf8] sm:$0xff]
    %v591 = vld [vmem:[#allocation8 + $0x100] sm:$0xff]
    %v592 = vld [vmem:[#allocation8 + $0x108] sm:$0xff]
    %v593 = vld [vmem:[#allocation8 + $0x110] sm:$0xff]
    %v594 = vld [vmem:[#allocation8 + $0x118] sm:$0xff]
    %v595 = vld [vmem:[#allocation8 + $0x120] sm:$0xff]
    %v596 = vld [vmem:[#allocation8 + $0x128] sm:$0xff]
    %v597 = vld [vmem:[#allocation8 + $0x130] sm:$0xff]
    %v598 = vld [vmem:[#allocation8 + $0x138] sm:$0xff]
    %v599 = vld [vmem:[#allocation8 + $0x140] sm:$0xff]
    %v600 = vld [vmem:[#allocation8 + $0x148] sm:$0xff]
    %v601 = vld [vmem:[#allocation8 + $0x150] sm:$0xff]
    %v602 = vld [vmem:[#allocation8 + $0x158] sm:$0xff]
    %v603 = vld [vmem:[#allocation8 + $0x160] sm:$0xff]
    %v604 = vld [vmem:[#allocation8 + $0x168] sm:$0xff]
    %v605 = vld [vmem:[#allocation8 + $0x170] sm:$0xff]
    %v606 = vld [vmem:[#allocation8 + $0x178] sm:$0xff]
    %v607 = vld [vmem:[#allocation8 + $0x180] sm:$0xff]
    %v608 = vld [vmem:[#allocation8 + $0x188] sm:$0xff]
    %v609 = vld [vmem:[#allocation8 + $0x190] sm:$0xff]
    %v610 = vld [vmem:[#allocation8 + $0x198] sm:$0xff]
    %v611 = vld [vmem:[#allocation8 + $0x1a0] sm:$0xff]
    %v612 = vld [vmem:[#allocation8 + $0x1a8] sm:$0xff]
    %v613 = vld [vmem:[#allocation8 + $0x1b0] sm:$0xff]
    %v614 = vld [vmem:[#allocation8 + $0x1b8] sm:$0xff]
    %v615 = vld [vmem:[#allocation8 + $0x1c0] sm:$0xff]
    %v616 = vld [vmem:[#allocation8 + $0x1c8] sm:$0xff]
    %v617 = vld [vmem:[#allocation8 + $0x1d0] sm:$0xff]
    %v618 = vld [vmem:[#allocation8 + $0x1d8] sm:$0xff]
    %v619 = vld [vmem:[#allocation8 + $0x1e0] sm:$0xff]
    %v620 = vld [vmem:[#allocation8 + $0x1e8] sm:$0xff]
    %v621 = vld [vmem:[#allocation8 + $0x1f0] sm:$0xff]
    %v622 = vld [vmem:[#allocation8 + $0x1f8] sm:$0xff]
    %v687 = vunpack.c.l.b16 %v559
    %v688 = vunpack.c.h.b16 %v559
    %v689 = vunpack.c.l.b16 %v560
    %v690 = vunpack.c.h.b16 %v560
    %v691 = vunpack.c.l.b16 %v561
    %v692 = vunpack.c.h.b16 %v561
    %v693 = vunpack.c.l.b16 %v562
    %v694 = vunpack.c.h.b16 %v562
    %v695 = vunpack.c.l.b16 %v563
    %v696 = vunpack.c.h.b16 %v563
    %v697 = vunpack.c.l.b16 %v564
    %v698 = vunpack.c.h.b16 %v564
    %v699 = vunpack.c.l.b16 %v565
    %v700 = vunpack.c.h.b16 %v565
    %v701 = vunpack.c.l.b16 %v566
    %v702 = vunpack.c.h.b16 %v566
    %v703 = vunpack.c.l.b16 %v567
    %v704 = vunpack.c.h.b16 %v567
    %v705 = vunpack.c.l.b16 %v568
    %v706 = vunpack.c.h.b16 %v568
    %v707 = vunpack.c.l.b16 %v569
    %v708 = vunpack.c.h.b16 %v569
    %v709 = vunpack.c.l.b16 %v570
    %v710 = vunpack.c.h.b16 %v570
    %v711 = vunpack.c.l.b16 %v571
    %v712 = vunpack.c.h.b16 %v571
    %v713 = vunpack.c.l.b16 %v572
    %v714 = vunpack.c.h.b16 %v572
    %v715 = vunpack.c.l.b16 %v573
    %v716 = vunpack.c.h.b16 %v573
    %v717 = vunpack.c.l.b16 %v574
    %v718 = vunpack.c.h.b16 %v574
    %v719 = vunpack.c.l.b16 %v575
    %v720 = vunpack.c.h.b16 %v575
    %v721 = vunpack.c.l.b16 %v576
    %v722 = vunpack.c.h.b16 %v576
    %v723 = vunpack.c.l.b16 %v577
    %v724 = vunpack.c.h.b16 %v577
    %v725 = vunpack.c.l.b16 %v578
    %v726 = vunpack.c.h.b16 %v578
    %v727 = vunpack.c.l.b16 %v579
    %v728 = vunpack.c.h.b16 %v579
    %v729 = vunpack.c.l.b16 %v580
    %v730 = vunpack.c.h.b16 %v580
    %v731 = vunpack.c.l.b16 %v581
    %v732 = vunpack.c.h.b16 %v581
    %v733 = vunpack.c.l.b16 %v582
    %v734 = vunpack.c.h.b16 %v582
    %v735 = vunpack.c.l.b16 %v583
    %v736 = vunpack.c.h.b16 %v583
    %v737 = vunpack.c.l.b16 %v584
    %v738 = vunpack.c.h.b16 %v584
    %v739 = vunpack.c.l.b16 %v585
    %v740 = vunpack.c.h.b16 %v585
    %v741 = vunpack.c.l.b16 %v586
    %v742 = vunpack.c.h.b16 %v586
    %v743 = vunpack.c.l.b16 %v587
    %v744 = vunpack.c.h.b16 %v587
    %v745 = vunpack.c.l.b16 %v588
    %v746 = vunpack.c.h.b16 %v588
    %v747 = vunpack.c.l.b16 %v589
    %v748 = vunpack.c.h.b16 %v589
    %v749 = vunpack.c.l.b16 %v590
    %v750 = vunpack.c.h.b16 %v590
    %v751 = vunpack.c.l.b16 %v591
    %v752 = vunpack.c.h.b16 %v591
    %v753 = vunpack.c.l.b16 %v592
    %v754 = vunpack.c.h.b16 %v592
    %v755 = vunpack.c.l.b16 %v593
    %v756 = vunpack.c.h.b16 %v593
    %v757 = vunpack.c.l.b16 %v594
    %v758 = vunpack.c.h.b16 %v594
    %v759 = vunpack.c.l.b16 %v595
    %v760 = vunpack.c.h.b16 %v595
    %v761 = vunpack.c.l.b16 %v596
    %v762 = vunpack.c.h.b16 %v596
    %v763 = vunpack.c.l.b16 %v597
    %v764 = vunpack.c.h.b16 %v597
    %v765 = vunpack.c.l.b16 %v598
    %v766 = vunpack.c.h.b16 %v598
    %v767 = vunpack.c.l.b16 %v599
    %v768 = vunpack.c.h.b16 %v599
    %v769 = vunpack.c.l.b16 %v600
    %v770 = vunpack.c.h.b16 %v600
    %v771 = vunpack.c.l.b16 %v601
    %v772 = vunpack.c.h.b16 %v601
    %v773 = vunpack.c.l.b16 %v602
    %v774 = vunpack.c.h.b16 %v602
    %v775 = vunpack.c.l.b16 %v603
    %v776 = vunpack.c.h.b16 %v603
    %v777 = vunpack.c.l.b16 %v604
    %v778 = vunpack.c.h.b16 %v604
    %v779 = vunpack.c.l.b16 %v605
    %v780 = vunpack.c.h.b16 %v605
    %v781 = vunpack.c.l.b16 %v606
    %v782 = vunpack.c.h.b16 %v606
    %v783 = vunpack.c.l.b16 %v607
    %v784 = vunpack.c.h.b16 %v607
    %v785 = vunpack.c.l.b16 %v608
    %v786 = vunpack.c.h.b16 %v608
    %v787 = vunpack.c.l.b16 %v609
    %v788 = vunpack.c.h.b16 %v609
    %v789 = vunpack.c.l.b16 %v610
    %v790 = vunpack.c.h.b16 %v610
    %v791 = vunpack.c.l.b16 %v611
    %v792 = vunpack.c.h.b16 %v611
    %v793 = vunpack.c.l.b16 %v612
    %v794 = vunpack.c.h.b16 %v612
    %v795 = vunpack.c.l.b16 %v613
    %v796 = vunpack.c.h.b16 %v613
    %v797 = vunpack.c.l.b16 %v614
    %v798 = vunpack.c.h.b16 %v614
    %v799 = vunpack.c.l.b16 %v615
    %v800 = vunpack.c.h.b16 %v615
    %v801 = vunpack.c.l.b16 %v616
    %v802 = vunpack.c.h.b16 %v616
    %v803 = vunpack.c.l.b16 %v617
    %v804 = vunpack.c.h.b16 %v617
    %v805 = vunpack.c.l.b16 %v618
    %v806 = vunpack.c.h.b16 %v618
    %v807 = vunpack.c.l.b16 %v619
    %v808 = vunpack.c.h.b16 %v619
    %v809 = vunpack.c.l.b16 %v620
    %v810 = vunpack.c.h.b16 %v620
    %v811 = vunpack.c.l.b16 %v621
    %v812 = vunpack.c.h.b16 %v621
    %v813 = vunpack.c.l.b16 %v622
    %v814 = vunpack.c.h.b16 %v622
    %v815 = vpack.c.b16 %v689, %v687
    %v816 = vpack.c.b16 %v690, %v688
    %v817 = vpack.c.b16 %v693, %v691
    %v818 = vpack.c.b16 %v694, %v692
    %v819 = vpack.c.b16 %v697, %v695
    %v820 = vpack.c.b16 %v698, %v696
    %v821 = vpack.c.b16 %v701, %v699
    %v822 = vpack.c.b16 %v702, %v700
    %v823 = vpack.c.b16 %v705, %v703
    %v824 = vpack.c.b16 %v706, %v704
    %v825 = vpack.c.b16 %v709, %v707
    %v826 = vpack.c.b16 %v710, %v708
    %v827 = vpack.c.b16 %v713, %v711
    %v828 = vpack.c.b16 %v714, %v712
    %v829 = vpack.c.b16 %v717, %v715
    %v830 = vpack.c.b16 %v718, %v716
    %v831 = vpack.c.b16 %v721, %v719
    %v832 = vpack.c.b16 %v722, %v720
    %v833 = vpack.c.b16 %v725, %v723
    %v834 = vpack.c.b16 %v726, %v724
    %v835 = vpack.c.b16 %v729, %v727
    %v836 = vpack.c.b16 %v730, %v728
    %v837 = vpack.c.b16 %v733, %v731
    %v838 = vpack.c.b16 %v734, %v732
    %v839 = vpack.c.b16 %v737, %v735
    %v840 = vpack.c.b16 %v738, %v736
    %v841 = vpack.c.b16 %v741, %v739
    %v842 = vpack.c.b16 %v742, %v740
    %v843 = vpack.c.b16 %v745, %v743
    %v844 = vpack.c.b16 %v746, %v744
    %v845 = vpack.c.b16 %v749, %v747
    %v846 = vpack.c.b16 %v750, %v748
    %v847 = vpack.c.b16 %v753, %v751
    %v848 = vpack.c.b16 %v754, %v752
    %v849 = vpack.c.b16 %v757, %v755
    %v850 = vpack.c.b16 %v758, %v756
    %v851 = vpack.c.b16 %v761, %v759
    %v852 = vpack.c.b16 %v762, %v760
    %v853 = vpack.c.b16 %v765, %v763
    %v854 = vpack.c.b16 %v766, %v764
    %v855 = vpack.c.b16 %v769, %v767
    %v856 = vpack.c.b16 %v770, %v768
    %v857 = vpack.c.b16 %v773, %v771
    %v858 = vpack.c.b16 %v774, %v772
    %v859 = vpack.c.b16 %v777, %v775
    %v860 = vpack.c.b16 %v778, %v776
    %v861 = vpack.c.b16 %v781, %v779
    %v862 = vpack.c.b16 %v782, %v780
    %v863 = vpack.c.b16 %v785, %v783
    %v864 = vpack.c.b16 %v786, %v784
    %v865 = vpack.c.b16 %v789, %v787
    %v866 = vpack.c.b16 %v790, %v788
    %v867 = vpack.c.b16 %v793, %v791
    %v868 = vpack.c.b16 %v794, %v792
    %v869 = vpack.c.b16 %v797, %v795
    %v870 = vpack.c.b16 %v798, %v796
    %v871 = vpack.c.b16 %v801, %v799
    %v872 = vpack.c.b16 %v802, %v800
    %v873 = vpack.c.b16 %v805, %v803
    %v874 = vpack.c.b16 %v806, %v804
    %v875 = vpack.c.b16 %v809, %v807
    %v876 = vpack.c.b16 %v810, %v808
    %v877 = vpack.c.b16 %v813, %v811
    %v878 = vpack.c.b16 %v814, %v812
    %943 = vmatprep.subr.bf16.mxu0 %v830
    %944 = vmatpush1.bf16.msra.mxu0 %v829
    %945 = vmatprep.subr.bf16.mxu0 %v828
    %946 = vmatpush1.bf16.msra.mxu0 %v827
    %947 = vmatprep.subr.bf16.mxu0 %v826
    %948 = vmatpush1.bf16.msra.mxu0 %v825
    %949 = vmatprep.subr.bf16.mxu0 %v824
    %950 = vmatpush1.bf16.msra.mxu0 %v823
    %951 = vmatprep.subr.bf16.mxu0 %v822
    %952 = vmatpush1.bf16.msra.mxu0 %v821
    %953 = vmatprep.subr.bf16.mxu0 %v820
    %954 = vmatpush1.bf16.msra.mxu0 %v819
    %955 = vmatprep.subr.bf16.mxu0 %v818
    %956 = vmatpush1.bf16.msra.mxu0 %v817
    %957 = vmatprep.subr.bf16.mxu0 %v816
    %958 = vmatpush1.bf16.msra.mxu0 %v815
    %959 = vmatprep.subr.bf16.mxu0 %v846
    %960 = vmatpush2.bf16.msra.mxu0 %v845
    %961 = vmatprep.subr.bf16.mxu0 %v844
    %962 = vmatpush2.bf16.msra.mxu0 %v843
    %963 = vmatprep.subr.bf16.mxu0 %v842
    %964 = vmatpush2.bf16.msra.mxu0 %v841
    %965 = vmatprep.subr.bf16.mxu0 %v840
    %966 = vmatpush2.bf16.msra.mxu0 %v839
    %967 = vmatprep.subr.bf16.mxu0 %v838
    %968 = vmatpush2.bf16.msra.mxu0 %v837
    %969 = vmatprep.subr.bf16.mxu0 %v836
    %970 = vmatpush2.bf16.msra.mxu0 %v835
    %971 = vmatprep.subr.bf16.mxu0 %v834
    %972 = vmatpush2.bf16.msra.mxu0 %v833
    %973 = vmatprep.subr.bf16.mxu0 %v832
    %974 = vmatpush2.bf16.msra.mxu0 %v831
    %975 = vmatprep.mubr.bf16.mxu0 %v556
    %976 = vmatmul.mubr.bf16.gmra.mxu0 %v555
    %v977 = vpop.f32.mrf.mxu0
    %v978 = vadd.f32 0.0, %v977
    %v979 = vpop.f32.mrf.mxu0
    %v980 = vadd.f32 0.0, %v979
    %v981 = vpop.f32.mrf.mxu0
    %v982 = vpop.f32.mrf.mxu0
    %983 = vdwg.mxu0
    %984 = vmatprep.subr.bf16.mxu0 %v862
    %985 = vmatpush1.bf16.msra.mxu0 %v861
    %986 = vmatprep.subr.bf16.mxu0 %v860
    %987 = vmatpush1.bf16.msra.mxu0 %v859
    %988 = vmatprep.subr.bf16.mxu0 %v858
    %989 = vmatpush1.bf16.msra.mxu0 %v857
    %990 = vmatprep.subr.bf16.mxu0 %v856
    %991 = vmatpush1.bf16.msra.mxu0 %v855
    %992 = vmatprep.subr.bf16.mxu0 %v854
    %993 = vmatpush1.bf16.msra.mxu0 %v853
    %994 = vmatprep.subr.bf16.mxu0 %v852
    %995 = vmatpush1.bf16.msra.mxu0 %v851
    %996 = vmatprep.subr.bf16.mxu0 %v850
    %997 = vmatpush1.bf16.msra.mxu0 %v849
    %998 = vmatprep.subr.bf16.mxu0 %v848
    %999 = vmatpush1.bf16.msra.mxu0 %v847
    %1000 = vmatprep.subr.bf16.mxu0 %v878
    %1001 = vmatpush2.bf16.msra.mxu0 %v877
    %1002 = vmatprep.subr.bf16.mxu0 %v876
    %1003 = vmatpush2.bf16.msra.mxu0 %v875
    %1004 = vmatprep.subr.bf16.mxu0 %v874
    %1005 = vmatpush2.bf16.msra.mxu0 %v873
    %1006 = vmatprep.subr.bf16.mxu0 %v872
    %1007 = vmatpush2.bf16.msra.mxu0 %v871
    %1008 = vmatprep.subr.bf16.mxu0 %v870
    %1009 = vmatpush2.bf16.msra.mxu0 %v869
    %1010 = vmatprep.subr.bf16.mxu0 %v868
    %1011 = vmatpush2.bf16.msra.mxu0 %v867
    %1012 = vmatprep.subr.bf16.mxu0 %v866
    %1013 = vmatpush2.bf16.msra.mxu0 %v865
    %1014 = vmatprep.subr.bf16.mxu0 %v864
    %1015 = vmatpush2.bf16.msra.mxu0 %v863
    %1016 = vmatprep.mubr.bf16.mxu0 %v558
    %1017 = vmatmul.mubr.bf16.gmra.mxu0 %v557
    %v1018 = vpop.f32.mrf.mxu0
    %v1019 = vadd.f32 %v978, %v1018
    %v1020 = vpop.f32.mrf.mxu0
    %v1021 = vadd.f32 %v980, %v1020
    %v1022 = vpop.f32.mrf.mxu0
    %v1023 = vpop.f32.mrf.mxu0
    %1024 = vdwg.mxu0
    %1025 = vst [vmem:[#allocation10] sm:$0xff] %v1019
    %1026 = vst [vmem:[#allocation10 + $0x8] sm:$0xff] %v1021
    // Predicated region
    $region34: #{tpu_custom_call.1} parent=1 // pred_check
      _
    $region35: #{tpu_custom_call.1} parent=1 // pred_check_branch
      %1028 = sbr.rel (0) target = $region37
    $region36: #{tpu_custom_call.1} parent=1 // pred_region
      %s1030 = ssub.s32 256, 256
      %1031 = vsyncadd [#allocation4], %s1030
      %s1033 = sshll.u32 [#allocation10], 4
      %s1034 = int_to_ptr.vmem [resolvable:$true] %s1033
      %1036 = dma.vmem_to_hbm [thread:$0]  %s1034, 256, %s4, [#allocation4]
    $region37: #{tpu_custom_call.1} parent=1 // pred_fallthru
      _
    // Predicated region
    $region38: #{tpu_custom_call.1} parent=1 // pred_check
      _
    $region39: #{tpu_custom_call.1} parent=1 // pred_check_branch
      %1038 = sbr.rel (0) target = $region41
    $region40: #{tpu_custom_call.1} parent=1 // pred_region
      %1039 = dma.done [#allocation4], 256
    $region41: #{tpu_custom_call.1} parent=1 // pred_fallthru
      _
    %1040 = vsyncpa [#allocation3], 1
    %1041 = vsyncpa [#allocation6], 1
    %1042 = vsyncpa [#allocation9], 1
    %1043 = vsyncpa [#allocation4], 1

</llo_original>
